<compile_context>
chip_gen: v6e
topology: v6e:2x2x1
jax: 0.10.0
libtpu: 0.0.40
codegen_flags: <defaults>
</compile_context>

<pallas_src>
import functools

import jax
import jax.numpy as jnp
from jax.experimental import pallas as pl
from jax.experimental.pallas import tpu as pltpu

_MiB = 1024 * 1024


def _layernorm_kernel(x_ref, scale_ref, shift_ref, o_ref, *, eps, affine_dtype):
    # x_ref: (tile_rows, emb_dim); scale_ref/shift_ref: (1, emb_dim), already in
    # affine_dtype. Stats (mean/var/rsqrt) are always f32 (matches PyTorch
    # LayerNorm with unbiased=False and avoids E[x^2]-mean^2 cancellation); the
    # final affine runs in affine_dtype to cut the tile-wide intermediate
    # footprint when I/O is bf16 on v6e/v7x.
    x = x_ref[...].astype(jnp.float32)
    mean = jnp.mean(x, axis=-1, keepdims=True)
    centered = x - mean
    var = jnp.mean(centered * centered, axis=-1, keepdims=True)
    inv_std = jax.lax.rsqrt(var + eps)
    norm = (centered * inv_std).astype(affine_dtype)
    out = scale_ref[...] * norm + shift_ref[...]
    o_ref[...] = out.astype(o_ref.dtype)


def _tpu_generation():
    """Returns (num_tensorcores_per_chip, vmem_bytes_per_core, has_bf16_vpu)."""
    kind = ""
    try:
        kind = jax.devices()[0].device_kind.lower()
    except Exception:
        pass
    if "v7" in kind:
        return 2, 64 * _MiB, True
    if "v6" in kind:
        return 1, 128 * _MiB, True
    if "v5" in kind:
        return 1, 128 * _MiB, False
    # Unknown generation: conservative (single TC, small VMEM, f32-only VPU).
    return 1, 64 * _MiB, False


def _row_multiple(dtype) -> int:
    # Sublane packing granularity: 8 rows/vreg for 32-bit, 16 for 16-bit,
    # 32 for 8-bit dtypes.
    itemsize = jnp.dtype(dtype).itemsize
    if itemsize >= 4:
        return 8
    if itemsize == 2:
        return 16
    return 32


def _per_row_bytes(emb_dim: int, io_itemsize: int, affine_itemsize: int) -> int:
    # Double-buffered input + output tiles, plus in-kernel intermediates:
    # ~2 f32 full-tile copies for the stats path (x, centered) and ~2 copies in
    # the affine dtype (norm, out).
    io_bytes = 2 * 2 * emb_dim * io_itemsize
    tmp_bytes = emb_dim * (2 * 4 + 2 * affine_itemsize)
    return io_bytes + tmp_bytes


def _choose_tile_rows(rows, emb_dim, dtype, affine_dtype, num_tc, vmem_per_core):
    io_itemsize = jnp.dtype(dtype).itemsize
    affine_itemsize = jnp.dtype(affine_dtype).itemsize
    row_mult = _row_multiple(dtype)
    if rows <= row_mult:
        # Single full-extent block along rows (allowed even if not a multiple of 8).
        return rows

    bytes_per_row = _per_row_bytes(emb_dim, io_itemsize, affine_itemsize)

    # Keep the whole per-step working set well inside one TensorCore's VMEM:
    # 3/8 of physical capacity, capped at 32 MiB (>=512-row tiles already sit
    # on the HBM-roofline plateau, so bigger tiles buy nothing).
    budget = min(32 * _MiB, (vmem_per_core * 3) // 8)

    t = budget // max(bytes_per_row, 1)
    t = max(row_mult, min(int(t), 2048))
    t = (t // row_mult) * row_mult

    rows_padded = pl.cdiv(rows, row_mult) * row_mult
    t = min(t, rows_padded)

    if num_tc > 1:
        # Multi-TC chips (v7x): aim for >= 2 grid steps per TensorCore so each
        # core overlaps its out-DMA with the next in-DMA — but only when each
        # step keeps >= 256 rows (stays near the HBM roofline).
        min_steps = 2 * num_tc
        per_step = pl.cdiv(pl.cdiv(rows, min_steps), row_mult) * row_mult
        if per_step >= 256:
            t = min(t, per_step)
        else:
            # At least give each TensorCore one block when rows allow.
            per_tc = pl.cdiv(pl.cdiv(rows, num_tc), row_mult) * row_mult
            if per_tc >= row_mult:
                t = min(t, per_tc)
    # Single-TC chips (v5e/v6e): no forced splitting — per-step overhead only
    # hurts a memory-bound kernel.
    return max(row_mult, t)


def layernorm(x, scale, shift, *, eps=1e-5, tile_rows=None):
    """LayerNorm over the last axis of x. x: (..., emb_dim); scale/shift: (emb_dim,)."""
    orig_shape = x.shape
    emb_dim = orig_shape[-1]
    rows = 1
    for d in orig_shape[:-1]:
        rows *= d

    num_tc, vmem_per_core, bf16_vpu = _tpu_generation()

    # Final affine in bf16 only when I/O is bf16 and the chip has a bf16 VPU
    # (v6e/v7x); stats stay f32 regardless. v5e keeps everything f32.
    if bf16_vpu and x.dtype == jnp.bfloat16:
        affine_dtype = jnp.bfloat16
    else:
        affine_dtype = jnp.float32

    # Note: for emb_dim not a multiple of 128 the lane axis is under-filled and
    # stores are masked (lane efficiency = emb_dim/128); typical transformer
    # emb_dims (multiples of 128) are unaffected.
    x2d = x.reshape(rows, emb_dim)
    # Pre-cast params to the affine compute dtype; constant index_map keeps
    # them resident across grid steps, so no per-step re-cast in the body.
    scale2d = scale.reshape(1, emb_dim).astype(affine_dtype)
    shift2d = shift.reshape(1, emb_dim).astype(affine_dtype)

    if tile_rows is None:
        tile_rows = _choose_tile_rows(
            rows, emb_dim, x.dtype, affine_dtype, num_tc, vmem_per_core
        )

    grid = (pl.cdiv(rows, tile_rows),)

    # Explicit VMEM limit: double-buffered in+out tiles + f32/affine
    # intermediates + params + headroom, clamped below per-core physical VMEM
    # (leave >= 8 MiB for Mosaic's own scratch).
    io_itemsize = jnp.dtype(x.dtype).itemsize
    affine_itemsize = jnp.dtype(affine_dtype).itemsize
    param_bytes = 2 * 2 * emb_dim * affine_itemsize
    working_bytes = tile_rows * _per_row_bytes(emb_dim, io_itemsize, affine_itemsize)
    needed = working_bytes + param_bytes + 8 * _MiB
    vmem_limit = int(max(16 * _MiB, min(needed, vmem_per_core - 8 * _MiB)))

    out = pl.pallas_call(
        functools.partial(_layernorm_kernel, eps=eps, affine_dtype=affine_dtype),
        out_shape=jax.ShapeDtypeStruct((rows, emb_dim), x.dtype),
        grid_spec=pltpu.PrefetchScalarGridSpec(
            num_scalar_prefetch=0,
            grid=grid,
            in_specs=[
                pl.BlockSpec((tile_rows, emb_dim), lambda i: (i, 0)),
                pl.BlockSpec((1, emb_dim), lambda i: (0, 0)),
                pl.BlockSpec((1, emb_dim), lambda i: (0, 0)),
            ],
            out_specs=pl.BlockSpec((tile_rows, emb_dim), lambda i: (i, 0)),
        ),
        compiler_params=pltpu.CompilerParams(
            dimension_semantics=("parallel",),
            vmem_limit_bytes=vmem_limit,
        ),
    )(x2d, scale2d, shift2d)

    return out.reshape(orig_shape)


def _reference(x, scale, shift, eps=1e-5):
    xf = x.astype(jnp.float32)
    mean = jnp.mean(xf, axis=-1, keepdims=True)
    var = jnp.mean((xf - mean) ** 2, axis=-1, keepdims=True)
    return scale.astype(jnp.float32) * ((xf - mean) / jnp.sqrt(var + eps)) + shift.astype(
        jnp.float32
    )


if __name__ == "__main__":
    key = jax.random.PRNGKey(0)
    eps = 1e-5

    # --- Primary test: module-style shape (batch=2, seq=8, emb_dim=32), f32 ---
    batch, seq, emb_dim = 2, 8, 32
    k0, k1, k2 = jax.random.split(key, 3)
    x = jax.random.normal(k0, (batch, seq, emb_dim), dtype=jnp.float32)
    scale = jnp.ones((emb_dim,), dtype=jnp.float32)   # nn.Parameter(torch.ones(emb_dim))
    shift = jnp.zeros((emb_dim,), dtype=jnp.float32)  # nn.Parameter(torch.zeros(emb_dim))

    out = jax.block_until_ready(layernorm(x, scale, shift, eps=eps))
    ref = _reference(x, scale, shift, eps)
    assert jnp.allclose(out, ref, atol=1e-5, rtol=1e-5), "f32 mismatch vs reference"

    # --- Boundary test: rows not divisible by the tile (exercises masked tail block) ---
    x_tail = jax.random.normal(k1, (3, 5, 64), dtype=jnp.float32)
    sc_t = jax.random.normal(k2, (64,), dtype=jnp.float32)
    sh_t = jnp.linspace(-1.0, 1.0, 64, dtype=jnp.float32)
    out_t = jax.block_until_ready(layernorm(x_tail, sc_t, sh_t, eps=eps))
    ref_t = _reference(x_tail, sc_t, sh_t, eps)
    assert jnp.allclose(out_t, ref_t, atol=1e-5, rtol=1e-5), "tail-block mismatch vs reference"

    # --- bf16 I/O test (f32 stats; bf16 affine on bf16-VPU chips) ---
    x_bf = jax.random.normal(k1, (2, 8, 128), dtype=jnp.float32).astype(jnp.bfloat16)
    sc_bf = jnp.ones((128,), dtype=jnp.float32)
    sh_bf = jnp.zeros((128,), dtype=jnp.float32)
    out_bf = jax.block_until_ready(layernorm(x_bf, sc_bf, sh_bf, eps=eps))
    ref_bf = _reference(x_bf, sc_bf, sh_bf, eps)
    assert jnp.allclose(out_bf.astype(jnp.float32), ref_bf, atol=3e-2, rtol=3e-2), (
        "bf16 mismatch vs reference"
    )

    # --- Explicit small-tile test: multiple grid steps on any generation ---
    x_ms = jax.random.normal(k2, (4, 16, 32), dtype=jnp.float32)
    out_ms = jax.block_until_ready(layernorm(x_ms, scale, shift, eps=eps, tile_rows=16))
    ref_ms = _reference(x_ms, scale, shift, eps)
    assert jnp.allclose(out_ms, ref_ms, atol=1e-5, rtol=1e-5), "multi-step mismatch vs reference"

    print("KERNEL_OK")
</pallas_src>

<mosaic_0001>
module attributes {stable_mosaic.version = 11 : i64} {
  func.func @_layernorm_kernel(%arg0: i32, %arg1: memref<16x32xf32, #tpu.memory_space<vmem>>, %arg2: memref<1x32xf32, #tpu.memory_space<vmem>>, %arg3: memref<1x32xf32, #tpu.memory_space<vmem>>, %arg4: memref<16x32xf32, #tpu.memory_space<vmem>>) attributes {dimension_semantics = [#tpu.dimension_semantics<parallel>], iteration_bounds = array<i64: 1>, scalar_prefetch = 0 : i64, scratch_operands = 0 : i64, tpu.core_type = #tpu.core_type<tc>, window_params = [{transform_indices = @transform_0, window_bounds = array<i64: 16, 32>}, {pipeline_mode = #tpu.pipeline_mode<synchronous>, transform_indices = @transform_1, window_bounds = array<i64: 1, 32>}, {pipeline_mode = #tpu.pipeline_mode<synchronous>, transform_indices = @transform_2, window_bounds = array<i64: 1, 32>}, {transform_indices = @transform_3, window_bounds = array<i64: 16, 32>}]} {
    %c0 = arith.constant 0 : index
    %c0_0 = arith.constant 0 : index
    %0 = vector.load %arg1[%c0, %c0_0] : memref<16x32xf32, #tpu.memory_space<vmem>>, vector<16x32xf32>
    %cst = arith.constant dense<0.000000e+00> : vector<16xf32>
    %1 = vector.multi_reduction <add>, %0, %cst [1] : vector<16x32xf32> to vector<16xf32>
    %2 = vector.shape_cast %1 : vector<16xf32> to vector<16x1xf32>
    %cst_1 = arith.constant 3.200000e+01 : f32
    %3 = vector.broadcast %cst_1 : f32 to vector<16x1xf32>
    %4 = arith.divf %2, %3 : vector<16x1xf32>
    %5 = vector.broadcast %4 : vector<16x1xf32> to vector<16x32xf32>
    %6 = arith.subf %0, %5 : vector<16x32xf32>
    %7 = arith.mulf %6, %6 : vector<16x32xf32>
    %cst_2 = arith.constant dense<0.000000e+00> : vector<16xf32>
    %8 = vector.multi_reduction <add>, %7, %cst_2 [1] : vector<16x32xf32> to vector<16xf32>
    %9 = vector.shape_cast %8 : vector<16xf32> to vector<16x1xf32>
    %cst_3 = arith.constant 3.200000e+01 : f32
    %10 = vector.broadcast %cst_3 : f32 to vector<16x1xf32>
    %11 = arith.divf %9, %10 : vector<16x1xf32>
    %cst_4 = arith.constant 9.99999974E-6 : f32
    %12 = vector.broadcast %cst_4 : f32 to vector<16x1xf32>
    %13 = arith.addf %11, %12 : vector<16x1xf32>
    %14 = math.rsqrt %13 : vector<16x1xf32>
    %15 = vector.broadcast %14 : vector<16x1xf32> to vector<16x32xf32>
    %16 = arith.mulf %6, %15 : vector<16x32xf32>
    %c0_5 = arith.constant 0 : index
    %c0_6 = arith.constant 0 : index
    %17 = vector.load %arg2[%c0_5, %c0_6] : memref<1x32xf32, #tpu.memory_space<vmem>>, vector<1x32xf32>
    %18 = vector.broadcast %17 : vector<1x32xf32> to vector<16x32xf32>
    %19 = arith.mulf %18, %16 : vector<16x32xf32>
    %c0_7 = arith.constant 0 : index
    %c0_8 = arith.constant 0 : index
    %20 = vector.load %arg3[%c0_7, %c0_8] : memref<1x32xf32, #tpu.memory_space<vmem>>, vector<1x32xf32>
    %21 = vector.broadcast %20 : vector<1x32xf32> to vector<16x32xf32>
    %22 = arith.addf %19, %21 : vector<16x32xf32>
    %c0_9 = arith.constant 0 : index
    %c0_10 = arith.constant 0 : index
    %23 = vector.load %arg4[%c0_9, %c0_10] : memref<16x32xf32, #tpu.memory_space<vmem>>, vector<16x32xf32>
    tpu.vector_store %arg4[%c0_9, %c0_10], %22 {strides = array<i32>} : memref<16x32xf32, #tpu.memory_space<vmem>>, vector<16x32xf32>,
    return
  }
  func.func @transform_0(%arg0: i32) -> (i32, i32) {
    %c0_i32 = arith.constant 0 : i32
    %c0_i32_0 = arith.constant 0 : i32
    return %arg0, %c0_i32 : i32, i32
  }
  func.func @transform_1(%arg0: i32) -> (i32, i32) {
    %c0_i32 = arith.constant 0 : i32
    %c0_i32_0 = arith.constant 0 : i32
    %c0_i32_1 = arith.constant 0 : i32
    return %c0_i32, %c0_i32_0 : i32, i32
  }
  func.func @transform_2(%arg0: i32) -> (i32, i32) {
    %c0_i32 = arith.constant 0 : i32
    %c0_i32_0 = arith.constant 0 : i32
    %c0_i32_1 = arith.constant 0 : i32
    return %c0_i32, %c0_i32_0 : i32, i32
  }
  func.func @transform_3(%arg0: i32) -> (i32, i32) {
    %c0_i32 = arith.constant 0 : i32
    %c0_i32_0 = arith.constant 0 : i32
    return %arg0, %c0_i32 : i32, i32
  }
}

</mosaic_0001>

<llo_original>
// kernel: tpu_custom_call.1
$region0: #{tpu_custom_call.1}
  #allocation0 [shape = 'u32[]', space=smem, size = 0x4, offset = 0x4, fixed_abs, tag = 'smem constant byte address 0x4 - core index']
  #allocation1 [shape = 'u32[144,128]{1,0:T(1,128)}', space=vmem, size = 0x12000, scoped, tag = 'internal scratch']
  %s0 = inlined_call_operand.hbm [shape: f32[16,32], index: 0, kind: input, shape index: {}]
  %s1 = inlined_call_operand.vmem [shape: f32[1,32], index: 1, kind: input, shape index: {}]
  %s2 = inlined_call_operand.vmem [shape: f32[1,32], index: 2, kind: input, shape index: {}]
  %s3 = inlined_call_operand.hbm [shape: f32[16,32], index: 3, kind: output, shape index: {}]
  %s4 = sld [smem:[#allocation0]]
  $region26: #{tpu_custom_call.1} parent=0
    _
  %s6 = ssub.s32 1, %s4
  %s7 = scalar_select 0, %s6, %s4
  $region1: #{tpu_custom_call.1} parent=0
    #allocation2 [shape = 'u8[8192]{0}', space=vmem, size = 0x2000, scoped, tag = 'input window, operand 0, single buffered']
    #allocation3 [shape = 's32[1]{0}', space=sflag, size = 0x4, scoped, tag = 'scoped memory for tpu_custom_call.1']
    #allocation4 [shape = 's32[1]{0}', space=sflag, size = 0x4, scoped, tag = 'scoped memory for tpu_custom_call.1']
    #allocation5 [shape = 'u8[8192]{0}', space=vmem, size = 0x2000, scoped, tag = 'output window, operand 0, single buffered']
    %8 = vsyncpa [#allocation3], 0
    %9 = vsyncpa [#allocation4], 0
    // Predicated region
    $region2: #{tpu_custom_call.1} parent=1 // pred_check
      _
    $region3: #{tpu_custom_call.1} parent=1 // pred_check_branch
      %11 = sbr.rel (0) target = $region5
    $region4: #{tpu_custom_call.1} parent=1 // pred_region
      %s13 = ssub.s32 256, 256
      %14 = vsyncadd [#allocation3], %s13
      %s15 = sshll.u32 [#allocation2], 4
      %s16 = int_to_ptr.vmem [resolvable:$true] %s15
      %21 = dma.hbm_to_vmem [thread:$0]  %s0, 256, %s16, [#allocation3], 128, 128, 8
    $region5: #{tpu_custom_call.1} parent=1 // pred_fallthru
      _
    // Predicated region
    $region6: #{tpu_custom_call.1} parent=1 // pred_check
      _
    $region7: #{tpu_custom_call.1} parent=1 // pred_check_branch
      %23 = sbr.rel (0) target = $region9
    $region8: #{tpu_custom_call.1} parent=1 // pred_region
      _
    $region9: #{tpu_custom_call.1} parent=1 // pred_fallthru
      _
    // Predicated region
    $region10: #{tpu_custom_call.1} parent=1 // pred_check
      _
    $region11: #{tpu_custom_call.1} parent=1 // pred_check_branch
      %25 = sbr.rel (0) target = $region13
    $region12: #{tpu_custom_call.1} parent=1 // pred_region
      _
    $region13: #{tpu_custom_call.1} parent=1 // pred_fallthru
      _
    // Predicated region
    $region14: #{tpu_custom_call.1} parent=1 // pred_check
      _
    $region15: #{tpu_custom_call.1} parent=1 // pred_check_branch
      %27 = sbr.rel (0) target = $region17
    $region16: #{tpu_custom_call.1} parent=1 // pred_region
      %28 = dma.done [#allocation3], 256
    $region17: #{tpu_custom_call.1} parent=1 // pred_fallthru
      _
    %v29 = vld [vmem:[#allocation2] sm:$0xff]
    %v30 = vld [vmem:[#allocation2 + $0x8] sm:$0xff]
    %vm31 = vcmask 261120
    %v32 = vsel %vm31, %v29, 0.0
    %33 = vadd.xlane.f32.xlu0 %v32
    %v34 = vpop.xlane.xlu0 %33
    %v35 = vsel %vm31, %v30, 0.0
    %36 = vadd.xlane.f32.xlu0 %v35
    %v37 = vpop.xlane.xlu0 %36
    %v38 = vrcp.pop 32.0
    %v39 = vmul.f32 %v34, %v38
    %v40 = vmul.f32 %v37, %v38
    %v41 = vsub.f32 %v29, %v39
    %v42 = vsub.f32 %v30, %v40
    %v43 = vmul.f32 %v41, %v41
    %v44 = vmul.f32 %v42, %v42
    %v45 = vsel %vm31, %v43, 0.0
    %46 = vadd.xlane.f32.xlu0 %v45
    %v47 = vpop.xlane.xlu0 %46
    %v48 = vsel %vm31, %v44, 0.0
    %49 = vadd.xlane.f32.xlu0 %v48
    %v50 = vpop.xlane.xlu0 %49
    %v51 = vmul.f32 %v47, %v38
    %v52 = vmul.f32 %v50, %v38
    %v53 = vadd.f32 %v51, 1e-05
    %v54 = vadd.f32 %v52, 1e-05
    %v55 = vrsqrt.pop %v53
    %v56 = vrsqrt.pop %v54
    %v57 = vmul.f32 %v41, %v55
    %v58 = vmul.f32 %v42, %v56
    %v59 = vld [vmem:[%s1] sm:$0x1]
    %v61 = vlaneseq
    %v62 = vshrl.u32 %v61, 7
    %v63 = vsub.s32 0, %v62
    %v64 = vrot.slane %v59, %v63
    %v66 = vmul.f32 %v64, %v57
    %v67 = vmul.f32 %v64, %v58
    %v68 = vld [vmem:[%s2] sm:$0x1]
    %v70 = vlaneseq
    %v71 = vshrl.u32 %v70, 7
    %v72 = vsub.s32 0, %v71
    %v73 = vrot.slane %v68, %v72
    %v75 = vadd.f32 %v66, %v73
    %v76 = vadd.f32 %v67, %v73
    %77 = vst.msk [vmem:[#allocation5] sm:$0xff] %vm31, %v75
    %78 = vst.msk [vmem:[#allocation5 + $0x8] sm:$0xff] %vm31, %v76
    // Predicated region
    $region18: #{tpu_custom_call.1} parent=1 // pred_check
      _
    $region19: #{tpu_custom_call.1} parent=1 // pred_check_branch
      %80 = sbr.rel (0) target = $region21
    $region20: #{tpu_custom_call.1} parent=1 // pred_region
      %s82 = ssub.s32 256, 256
      %83 = vsyncadd [#allocation4], %s82
      %s84 = sshll.u32 [#allocation5], 4
      %s85 = int_to_ptr.vmem [resolvable:$true] %s84
      %90 = dma.vmem_to_hbm [thread:$0]  %s85, 256, %s3, [#allocation4], 128, 128, 8
    $region21: #{tpu_custom_call.1} parent=1 // pred_fallthru
      _
    // Predicated region
    $region22: #{tpu_custom_call.1} parent=1 // pred_check
      _
    $region23: #{tpu_custom_call.1} parent=1 // pred_check_branch
      %92 = sbr.rel (0) target = $region25
    $region24: #{tpu_custom_call.1} parent=1 // pred_region
      %93 = dma.done [#allocation4], 256
    $region25: #{tpu_custom_call.1} parent=1 // pred_fallthru
      _
    %94 = vsyncpa [#allocation3], 1
    %95 = vsyncpa [#allocation4], 1

</llo_original>
